<compile_context>
chip_gen: v7x
topology: tpu7x:2x2x1
jax: 0.10.0
libtpu: 0.0.40
codegen_flags: <defaults>
</compile_context>

<pallas_src>
import jax
import jax.numpy as jnp
from jax.experimental import pallas as pl
from jax.experimental.pallas import tpu as pltpu

NPAD = 128              # lane-dense padded output width (2 real classes + 126 zero lanes)
_VMEM_BUDGET = 48 << 20  # conservative tile budget (v7x has only 64 MiB physical VMEM)


def _classifier_kernel(x_ref, w_ref, b_ref, o_ref):
    # TODO(synk): StackedEmbeddings / TransformerWordEmbeddings LM embedding has
    # no Pallas equivalent; contextualized embeddings arrive precomputed in x_ref.
    # Dropout is identity at inference and is omitted.
    x = jnp.maximum(x_ref[...], 0.0)                      # ReLU in native (f32) dtype
    acc = jnp.dot(x.astype(jnp.bfloat16), w_ref[...],
                  preferred_element_type=jnp.float32)     # MXU, f32 accumulation
    o_ref[...] = (acc + b_ref[...]).astype(jnp.bfloat16)  # lane-dense bf16 store


def _choose_tile(B, D, tb_target, in_itemsize):
    """Pick a batch tile (multiple of 16 rows) that fits VMEM and gives >=2
    grid steps for megacore once the batch is non-trivial."""
    resident = D * NPAD * 2 + NPAD * 4                    # bf16 weight + f32 bias
    per_row = 2 * (D * in_itemsize + NPAD * 2)            # 2x-buffered in tile + bf16 out tile
    avail = max(_VMEM_BUDGET - resident, 0)
    tb_vmem = max(16, (avail // per_row) // 16 * 16)
    tb_cap = max(16, min(tb_target, tb_vmem))
    min_steps = 2 if B > 32 else 1                        # let v7x's 2 TCs split the grid
    steps = max(min_steps, pl.cdiv(B, tb_cap))
    tb = 16 * pl.cdiv(pl.cdiv(B, steps), 16)
    return tb


def language_model_forward(x, w, b, *, tb_target=1024, force_pallas=False):
    """x: (B, D) embeddings, w: (2, D) (PyTorch Linear layout), b: (2,).

    Returns logits (B, 2) float32, matching nn.Linear(D, 2)(relu(dropout(x)))
    at inference (dropout = identity).
    """
    B, D = x.shape
    assert w.shape == (2, D) and b.shape == (2,)

    # Small-problem fallback: launch overhead + padded-output round trip dominate.
    if not force_pallas and (B < 16 or B * D < 8192):
        return jnp.maximum(x, 0.0) @ jnp.transpose(w) + b.reshape(1, 2)

    # One-time tiny layout plumbing (classifier head only; X is NOT touched).
    w_pad = jnp.zeros((D, NPAD), jnp.bfloat16).at[:, :2].set(
        jnp.transpose(w).astype(jnp.bfloat16))             # resident (D, 128) bf16
    b_pad = jnp.zeros((1, NPAD), jnp.float32).at[:, :2].set(
        b.astype(jnp.float32).reshape(1, 2))               # resident (1, 128) f32

    in_itemsize = jnp.dtype(x.dtype).itemsize
    tb = _choose_tile(B, D, tb_target, in_itemsize)
    grid = (pl.cdiv(B, tb),)   # non-dividing last block handled by Pallas masking

    resident_bytes = D * NPAD * 2 + NPAD * 4
    tile_bytes = 2 * (tb * D * in_itemsize + tb * NPAD * 2)
    vmem_limit = int(min(max(tile_bytes + resident_bytes + (4 << 20), 16 << 20),
                         60 << 20))

    cost = pl.CostEstimate(
        flops=2 * B * D * NPAD,
        transcendentals=0,
        bytes_accessed=B * D * in_itemsize + resident_bytes + B * NPAD * 2,
    )

    out_pad = pl.pallas_call(
        _classifier_kernel,
        out_shape=jax.ShapeDtypeStruct((B, NPAD), jnp.bfloat16),
        grid=grid,
        in_specs=[
            pl.BlockSpec((tb, D), lambda i: (i, 0)),      # streamed X tile, HBM-native dtype
            pl.BlockSpec((D, NPAD), lambda i: (0, 0)),    # resident weight
            pl.BlockSpec((1, NPAD), lambda i: (0, 0)),    # resident bias
        ],
        out_specs=pl.BlockSpec((tb, NPAD), lambda i: (i, 0)),
        compiler_params=pltpu.CompilerParams(
            dimension_semantics=("parallel",),
            vmem_limit_bytes=vmem_limit,
        ),
        cost_estimate=cost,
    )(x, w_pad, b_pad)

    return out_pad[:, :2].astype(jnp.float32)


if __name__ == "__main__":
    key = jax.random.PRNGKey(0)
    B, D = 48, 256  # batch of sentences, embedding_dim of the stacked LM

    kx, kw, kb = jax.random.split(key, 3)
    # "Contextualized embeddings" stand-in (what self.lm.embed would produce).
    x = jax.random.normal(kx, (B, D), dtype=jnp.float32)

    # Deterministic init of nn.Linear(D, 2): uniform(-1/sqrt(D), 1/sqrt(D)).
    bound = 1.0 / (D ** 0.5)
    w = jax.random.uniform(kw, (2, D), dtype=jnp.float32, minval=-bound, maxval=bound)
    b = jax.random.uniform(kb, (2,), dtype=jnp.float32, minval=-bound, maxval=bound)

    # Pallas path (bf16 matmul / bf16 store): validate against the true f32 model.
    logits = language_model_forward(x, w, b, force_pallas=True)
    jax.block_until_ready(logits)
    ref = jnp.maximum(x, 0.0) @ jnp.transpose(w) + b.reshape(1, 2)
    assert logits.shape == (B, 2)
    assert jnp.allclose(logits, ref, atol=5e-2, rtol=5e-2), \
        float(jnp.max(jnp.abs(logits - ref)))

    # Tiny-problem fallback path (fused XLA op) stays numerically exact.
    xs = jax.random.normal(jax.random.PRNGKey(1), (8, 32), dtype=jnp.float32)
    ws = jax.random.uniform(jax.random.PRNGKey(2), (2, 32), dtype=jnp.float32,
                            minval=-0.2, maxval=0.2)
    bs = jax.random.uniform(jax.random.PRNGKey(3), (2,), dtype=jnp.float32,
                            minval=-0.2, maxval=0.2)
    small = language_model_forward(xs, ws, bs)
    ref_small = jnp.maximum(xs, 0.0) @ jnp.transpose(ws) + bs.reshape(1, 2)
    assert small.shape == (8, 2)
    assert jnp.allclose(small, ref_small, atol=1e-5, rtol=1e-5)

    print("KERNEL_OK")
</pallas_src>

<mosaic_0001>
module attributes {stable_mosaic.version = 11 : i64} {
  func.func @_classifier_kernel(%arg0: i32, %arg1: memref<32x256xf32, #tpu.memory_space<vmem>>, %arg2: memref<256x128xbf16, #tpu.memory_space<vmem>>, %arg3: memref<1x128xf32, #tpu.memory_space<vmem>>, %arg4: memref<32x128xbf16, #tpu.memory_space<vmem>>) attributes {dimension_semantics = [#tpu.dimension_semantics<parallel>], iteration_bounds = array<i64: 2>, scalar_prefetch = 0 : i64, scratch_operands = 0 : i64, tpu.core_type = #tpu.core_type<tc>, window_params = [{transform_indices = @transform_0, window_bounds = array<i64: 32, 256>}, {pipeline_mode = #tpu.pipeline_mode<synchronous>, transform_indices = @transform_1, window_bounds = array<i64: 256, 128>}, {pipeline_mode = #tpu.pipeline_mode<synchronous>, transform_indices = @transform_2, window_bounds = array<i64: 1, 128>}, {transform_indices = @transform_3, window_bounds = array<i64: 32, 128>}]} {
    %c0 = arith.constant 0 : index
    %c0_0 = arith.constant 0 : index
    %0 = vector.load %arg1[%c0, %c0_0] : memref<32x256xf32, #tpu.memory_space<vmem>>, vector<32x256xf32>
    %cst = arith.constant 0.000000e+00 : f32
    %1 = vector.broadcast %cst : f32 to vector<32x256xf32>
    %2 = arith.maximumf %0, %1 : vector<32x256xf32>
    %3 = arith.truncf %2 : vector<32x256xf32> to vector<32x256xbf16>
    %c0_1 = arith.constant 0 : index
    %c0_2 = arith.constant 0 : index
    %4 = vector.load %arg2[%c0_1, %c0_2] : memref<256x128xbf16, #tpu.memory_space<vmem>>, vector<256x128xbf16>
    %cst_3 = arith.constant dense<0.000000e+00> : vector<32x128xf32>
    %5 = tpu.matmul %3, %4, %cst_3 {dimension_numbers = #tpu.dot_dimension_numbers<[1], [0], [0], [1], [0, 0, 1, 1], [], []>} : vector<32x256xbf16>, vector<256x128xbf16>, vector<32x128xf32> -> vector<32x128xf32>
    %c0_4 = arith.constant 0 : index
    %c0_5 = arith.constant 0 : index
    %6 = vector.load %arg3[%c0_4, %c0_5] : memref<1x128xf32, #tpu.memory_space<vmem>>, vector<1x128xf32>
    %7 = vector.broadcast %6 : vector<1x128xf32> to vector<32x128xf32>
    %8 = arith.addf %5, %7 : vector<32x128xf32>
    %9 = arith.truncf %8 : vector<32x128xf32> to vector<32x128xbf16>
    %c0_6 = arith.constant 0 : index
    %c0_7 = arith.constant 0 : index
    %10 = vector.load %arg4[%c0_6, %c0_7] : memref<32x128xbf16, #tpu.memory_space<vmem>>, vector<32x128xbf16>
    tpu.vector_store %arg4[%c0_6, %c0_7], %9 {strides = array<i32>} : memref<32x128xbf16, #tpu.memory_space<vmem>>, vector<32x128xbf16>,
    return
  }
  func.func @transform_0(%arg0: i32) -> (i32, i32) {
    %c0_i32 = arith.constant 0 : i32
    %c0_i32_0 = arith.constant 0 : i32
    return %arg0, %c0_i32 : i32, i32
  }
  func.func @transform_1(%arg0: i32) -> (i32, i32) {
    %c0_i32 = arith.constant 0 : i32
    %c0_i32_0 = arith.constant 0 : i32
    %c0_i32_1 = arith.constant 0 : i32
    return %c0_i32, %c0_i32_0 : i32, i32
  }
  func.func @transform_2(%arg0: i32) -> (i32, i32) {
    %c0_i32 = arith.constant 0 : i32
    %c0_i32_0 = arith.constant 0 : i32
    %c0_i32_1 = arith.constant 0 : i32
    return %c0_i32, %c0_i32_0 : i32, i32
  }
  func.func @transform_3(%arg0: i32) -> (i32, i32) {
    %c0_i32 = arith.constant 0 : i32
    %c0_i32_0 = arith.constant 0 : i32
    return %arg0, %c0_i32 : i32, i32
  }
}

</mosaic_0001>

<llo_original>
// kernel: tpu_custom_call.1
$region0: #{tpu_custom_call.1}
  #allocation0 [shape = 'u32[]', space=smem, size = 0x4, offset = 0x4, fixed_abs, tag = 'smem constant byte address 0x4 - core index']
  #allocation1 [shape = 'u32[144,128]{1,0:T(1,128)}', space=vmem, size = 0x12000, scoped, tag = 'internal scratch']
  %s0 = inlined_call_operand.hbm [shape: f32[48,256], index: 0, kind: input, shape index: {}]
  %s1 = inlined_call_operand.hbm [shape: bf16[256,128], index: 1, kind: input, shape index: {}]
  %s2 = inlined_call_operand.vmem [shape: f32[1,128], index: 2, kind: input, shape index: {}]
  %s3 = inlined_call_operand.hbm [shape: bf16[48,128], index: 3, kind: output, shape index: {}]
  %s4 = sld [smem:[#allocation0]]
  $region53: #{tpu_custom_call.1} parent=0
    _
  %s6 = ssub.s32 1, %s4
  %s7 = scalar_select 0, %s6, %s4
  $region1: #{tpu_custom_call.1} parent=0
    #allocation2 [shape = 'u8[65536]{0}', space=vmem, size = 0x10000, scoped, tag = 'input window, operand 0']
    #allocation3 [shape = 's32[2]{0}', space=sflag, size = 0x8, scoped, tag = 'scoped memory for tpu_custom_call.1']
    #allocation4 [shape = 's32[2]{0}', space=sflag, size = 0x8, scoped, tag = 'scoped memory for tpu_custom_call.1']
    #allocation5 [shape = 'u8[65536]{0}', space=vmem, size = 0x10000, scoped, tag = 'input window, operand 1, single buffered']
    #allocation6 [shape = 's32[1]{0}', space=sflag, size = 0x4, scoped, tag = 'scoped memory for tpu_custom_call.1']
    #allocation7 [shape = 'u8[16384]{0}', space=vmem, size = 0x4000, scoped, tag = 'output window, operand 0']
    %8 = vsyncpa [#allocation3], 0
    %s9 = scalar_lea.sflag [#allocation3], 1
    %10 = vsyncpa %s9, 0
    %11 = vsyncpa [#allocation6], 0
    %12 = vsyncpa [#allocation4], 0
    %s13 = scalar_lea.sflag [#allocation4], 1
    %14 = vsyncpa %s13, 0
    loop: start=0, step=1, limit=4
    $region2: #{tpu_custom_call.1} parent=1 // loop_pre_header
      _
    $region3: #{tpu_custom_call.1} parent=1 // loop_header
      %s16 = sphi 0, %s20
      %p17 = scmp.ge.s32.totalorder %s16, 4
      %s26 = sphi 0, %s28
      %s29 = sphi 0, %s26
      %s30 = sphi 0, %s29
      %s46 = sphi 0, %s30
      %s50 = sphi 0, %s50
      %s52 = sphi 0, %s50
      %s53 = sphi 0, %s52
      %s67 = sphi 0, %s53
      %s71 = sphi 0, %s71
      %s73 = sphi 0, %s71
      %s74 = sphi 0, %s73
      %s88 = sphi 0, %s74
      %s94 = sphi 0, %s96
      %s97 = sphi 0, %s94
      %s98 = sphi 0, %s97
      %s114 = sphi 0, %s98
    $region4: #{tpu_custom_call.1} parent=1 // loop_header_branch
      %19 = sbr.rel (%p17) target = $region8
    $region5: #{tpu_custom_call.1} parent=1 // loop_body
      %s21 = ssub.s32 %s16, 1
      %s22 = ssub.s32 %s16, 2
      %s23 = sadd.s32 %s16, 1
      %s24 = ssub.s32 %s16, %s23
      %p25 = scmp.eq.s32.totalorder %s24, 0
      %s27 = sadd.s32 %s26, 1
      %s28 = scalar_select %p25, %s26, %s27
      %p31 = pneg %p25
      %p32 = scmp.eq.s32.totalorder %s16, 1
      %p33 = por %p31, %p32
      %p34 = scmp.ne.s32.totalorder %s26, %s29
      %p35 = scmp.eq.s32.totalorder %s16, 0
      %p36 = por %p34, %p35
      %p37 = scmp.ne.s32.totalorder %s26, %s29
      %p38 = scmp.eq.s32.totalorder %s21, 1
      %p39 = por %p37, %p38
      %p40 = scmp.ne.s32.totalorder %s29, %s30
      %p41 = scmp.eq.s32.totalorder %s21, 0
      %p42 = por %p40, %p41
      %p43 = scmp.ne.s32.totalorder %s29, %s30
      %p44 = scmp.eq.s32.totalorder %s22, 1
      %p45 = por %p43, %p44
      %p47 = scmp.ne.s32.totalorder %s30, %s46
      %p48 = scmp.eq.s32.totalorder %s22, 0
      %p49 = por %p47, %p48
      %s51 = sadd.s32 %s50, 1
      %p54 = scmp.eq.s32.totalorder %s16, 1
      %p55 = scmp.ne.s32.totalorder %s50, %s52
      %p56 = scmp.eq.s32.totalorder %s16, 0
      %p57 = por %p55, %p56
      %p58 = scmp.ne.s32.totalorder %s50, %s52
      %p59 = scmp.eq.s32.totalorder %s21, 1
      %p60 = por %p58, %p59
      %p61 = scmp.ne.s32.totalorder %s52, %s53
      %p62 = scmp.eq.s32.totalorder %s21, 0
      %p63 = por %p61, %p62
      %p64 = scmp.ne.s32.totalorder %s52, %s53
      %p65 = scmp.eq.s32.totalorder %s22, 1
      %p66 = por %p64, %p65
      %p68 = scmp.ne.s32.totalorder %s53, %s67
      %p69 = scmp.eq.s32.totalorder %s22, 0
      %p70 = por %p68, %p69
      %s72 = sadd.s32 %s71, 1
      %p75 = scmp.eq.s32.totalorder %s16, 1
      %p76 = scmp.ne.s32.totalorder %s71, %s73
      %p77 = scmp.eq.s32.totalorder %s16, 0
      %p78 = por %p76, %p77
      %p79 = scmp.ne.s32.totalorder %s71, %s73
      %p80 = scmp.eq.s32.totalorder %s21, 1
      %p81 = por %p79, %p80
      %p82 = scmp.ne.s32.totalorder %s73, %s74
      %p83 = scmp.eq.s32.totalorder %s21, 0
      %p84 = por %p82, %p83
      %p85 = scmp.ne.s32.totalorder %s73, %s74
      %p86 = scmp.eq.s32.totalorder %s22, 1
      %p87 = por %p85, %p86
      %p89 = scmp.ne.s32.totalorder %s74, %s88
      %p90 = scmp.eq.s32.totalorder %s22, 0
      %p91 = por %p89, %p90
      %s92 = ssub.s32 %s16, %s23
      %p93 = scmp.eq.s32.totalorder %s92, 0
      %s95 = sadd.s32 %s94, 1
      %s96 = scalar_select %p93, %s94, %s95
      %p99 = pneg %p93
      %p100 = scmp.eq.s32.totalorder %s16, 1
      %p101 = por %p99, %p100
      %p102 = scmp.ne.s32.totalorder %s94, %s97
      %p103 = scmp.eq.s32.totalorder %s16, 0
      %p104 = por %p102, %p103
      %p105 = scmp.ne.s32.totalorder %s94, %s97
      %p106 = scmp.eq.s32.totalorder %s21, 1
      %p107 = por %p105, %p106
      %p108 = scmp.ne.s32.totalorder %s97, %s98
      %p109 = scmp.eq.s32.totalorder %s21, 0
      %p110 = por %p108, %p109
      %p111 = scmp.ne.s32.totalorder %s97, %s98
      %p112 = scmp.eq.s32.totalorder %s22, 1
      %p113 = por %p111, %p112
      %p115 = scmp.ne.s32.totalorder %s98, %s114
      %p116 = scmp.eq.s32.totalorder %s22, 0
      %p117 = por %p115, %p116
      %p118 = scmp.le.s32.totalorder 1, %s16
      %p119 = scmp.lt.s32.totalorder %s16, 3
      %p120 = pnand %p118, %p119
      %p121 = pneg %p120
      // Predicated region
      $region9: #{tpu_custom_call.1} parent=5 // pred_check
        _
      $region10: #{tpu_custom_call.1} parent=5 // pred_check_branch
        %123 = sbr.rel (%p120) target = $region12
      $region11: #{tpu_custom_call.1} parent=5 // pred_region
        %s124 = ssub.s32 %s16, 1
        // Predicated region
        $region13: #{tpu_custom_call.1} parent=11 // pred_check
          %p125 = pneg %p63
        $region14: #{tpu_custom_call.1} parent=11 // pred_check_branch
          %127 = sbr.rel (%p125) target = $region16
        $region15: #{tpu_custom_call.1} parent=11 // pred_region
          %s129 = ssub.s32 2048, 2048
          %130 = vsyncadd [#allocation6], %s129
          %s131 = sshll.u32 [#allocation5], 4
          %s132 = int_to_ptr.vmem [resolvable:$true] %s131
          %137 = dma.hbm_to_vmem [thread:$0]  %s1, 2048, %s132, [#allocation6], 64, 64, 4
        $region16: #{tpu_custom_call.1} parent=11 // pred_fallthru
          _
        // Predicated region
        $region17: #{tpu_custom_call.1} parent=11 // pred_check
          %p138 = pneg %p84
        $region18: #{tpu_custom_call.1} parent=11 // pred_check_branch
          %140 = sbr.rel (%p138) target = $region20
        $region19: #{tpu_custom_call.1} parent=11 // pred_region
          _
        $region20: #{tpu_custom_call.1} parent=11 // pred_fallthru
          _
      $region12: #{tpu_custom_call.1} parent=5 // pred_fallthru
        _
      %p141 = scmp.lt.s32.totalorder %s16, 2
      // Predicated region
      $region21: #{tpu_custom_call.1} parent=5 // pred_check
        %p142 = pneg %p141
      $region22: #{tpu_custom_call.1} parent=5 // pred_check_branch
        %144 = sbr.rel (%p142) target = $region24
      $region23: #{tpu_custom_call.1} parent=5 // pred_region
        // Predicated region
        $region25: #{tpu_custom_call.1} parent=23 // pred_check
          %p145 = pneg %p36
        $region26: #{tpu_custom_call.1} parent=23 // pred_check_branch
          %147 = sbr.rel (%p145) target = $region28
        $region27: #{tpu_custom_call.1} parent=23 // pred_region
          %s148 = sand.u32 %s26, 1
          %s149 = scalar_lea.sflag [#allocation3], %s148
          %s150 = sand.u32 %s26, 1
          %s151 = smul.addr %s150, 64
          %s152 = scalar_lea.vmem [#allocation2], %s151
          %s153 = smul.u32 4, %s16
          %s154 = ssub.s32 6, %s153
          %p155 = scmp.lt.s32.totalorder %s154, 4
          %s156 = scalar_select %p155, %s154, 4
          %s157 = smul.u32 128, %s156
          %s158 = smul.u32 %s157, 2
          %s160 = ssub.s32 1024, %s158
          %161 = vsyncadd %s149, %s160
          %p162 = scmp.ne.s32.totalorder 0, %s158
          %s163 = smul.addr %s153, 2
          %s164 = smul.addr %s163, 128
          %s165 = scalar_lea.hbm %s0, %s164
          %s166 = smul.u32 16, %s156
          %s167 = sshll.u32 %s152, 4
          %s168 = int_to_ptr.vmem [resolvable:$true] %s167
          %s169 = sshll.u32 %s166, 4
          %173 = dma.hbm_to_vmem [thread:$0]  (%p162), %s165, %s169, %s168, %s149, 256, 256, 16
        $region28: #{tpu_custom_call.1} parent=23 // pred_fallthru
          _
      $region24: #{tpu_custom_call.1} parent=5 // pred_fallthru
        _
      %p174 = scmp.le.s32.totalorder 1, %s16
      %p175 = scmp.lt.s32.totalorder %s16, 3
      %p176 = pnand %p174, %p175
      %p177 = pneg %p176
      // Predicated region
      $region29: #{tpu_custom_call.1} parent=5 // pred_check
        _
      $region30: #{tpu_custom_call.1} parent=5 // pred_check_branch
        %179 = sbr.rel (%p176) target = $region32
      $region31: #{tpu_custom_call.1} parent=5 // pred_region
        %s180 = ssub.s32 %s16, 1
        %s181 = sand.u32 %s29, 1
        %s182 = scalar_lea.sflag [#allocation3], %s181
        %s183 = sand.u32 %s29, 1
        %s184 = smul.addr %s183, 64
        %s185 = scalar_lea.vmem [#allocation2], %s184
        // Predicated region
        $region33: #{tpu_custom_call.1} parent=31 // pred_check
          %p186 = pneg %p42
        $region34: #{tpu_custom_call.1} parent=31 // pred_check_branch
          %188 = sbr.rel (%p186) target = $region36
        $region35: #{tpu_custom_call.1} parent=31 // pred_region
          %189 = dma.done %s182, 1024
        $region36: #{tpu_custom_call.1} parent=31 // pred_fallthru
          _
        // Predicated region
        $region37: #{tpu_custom_call.1} parent=31 // pred_check
          %p190 = pneg %p63
        $region38: #{tpu_custom_call.1} parent=31 // pred_check_branch
          %192 = sbr.rel (%p190) target = $region40
        $region39: #{tpu_custom_call.1} parent=31 // pred_region
          %193 = dma.done [#allocation6], 2048
        $region40: #{tpu_custom_call.1} parent=31 // pred_fallthru
          _
        %s194 = sand.u32 %s29, 1
        %s195 = scalar_lea.sflag [#allocation3], %s194
        %s196 = sand.u32 %s29, 1
        %s197 = smul.addr %s196, 64
        %s198 = scalar_lea.vmem [#allocation2], %s197
        %p199 = pneg %p42
        %p200 = pneg %p39
        %p201 = pneg %p63
        %p202 = pneg %p60
        %p203 = pneg %p84
        %p204 = pneg %p81
        %p205 = pneg %p110
        %p206 = pneg %p107
        %s207 = sand.u32 %s97, 1
        %s208 = scalar_lea.sflag [#allocation4], %s207
        %s209 = sand.u32 %s97, 1
        %s210 = smul.addr %s209, 16
        %s211 = scalar_lea.vmem [#allocation7], %s210
        %s212 = smul.u32 4, %s21
        %s213 = ssub.s32 6, %s212
        %p214 = scmp.lt.s32.totalorder %s213, 4
        %s215 = scalar_select %p214, %s213, 4
        %s216 = smul.u32 128, %s215
        %s217 = smul.u32 %s216, 2
        %s218 = smul.u32 4, %s21
        %s219 = ssub.s32 6, %s218
        %p220 = scmp.lt.s32.totalorder %s219, 4
        %s221 = scalar_select %p220, %s219, 4
        %s222 = smul.u32 64, %s221
        %v224 = vld [vmem:[%s185] sm:$0xff]
        %v225 = vld [vmem:[%s185 + $0x8] sm:$0xff]
        %v226 = vld [vmem:[%s185 + $0x10] sm:$0xff]
        %v227 = vld [vmem:[%s185 + $0x18] sm:$0xff]
        %v228 = vld [vmem:[%s185 + $0x20] sm:$0xff]
        %v229 = vld [vmem:[%s185 + $0x28] sm:$0xff]
        %v230 = vld [vmem:[%s185 + $0x30] sm:$0xff]
        %v231 = vld [vmem:[%s185 + $0x38] sm:$0xff]
        %v232 = vmax.f32 %v224, 0.0
        %v233 = vmax.f32 %v225, 0.0
        %v234 = vmax.f32 %v226, 0.0
        %v235 = vmax.f32 %v227, 0.0
        %v236 = vmax.f32 %v228, 0.0
        %v237 = vmax.f32 %v229, 0.0
        %v238 = vmax.f32 %v230, 0.0
        %v239 = vmax.f32 %v231, 0.0
        %v240 = vpack.c.bf16 %v234, %v232
        %v241 = vpack.c.bf16 %v235, %v233
        %v242 = vpack.c.bf16 %v238, %v236
        %v243 = vpack.c.bf16 %v239, %v237
        %v244 = vld [vmem:[#allocation5] sm:$0xf]
        %v245 = vld [vmem:[#allocation5 + $0x4] sm:$0xf]
        %v246 = vld [vmem:[#allocation5 + $0x8] sm:$0xf]
        %v247 = vld [vmem:[#allocation5 + $0xc] sm:$0xf]
        %v248 = vld [vmem:[#allocation5 + $0x10] sm:$0xf]
        %v249 = vld [vmem:[#allocation5 + $0x14] sm:$0xf]
        %v250 = vld [vmem:[#allocation5 + $0x18] sm:$0xf]
        %v251 = vld [vmem:[#allocation5 + $0x1c] sm:$0xf]
        %v252 = vld [vmem:[#allocation5 + $0x20] sm:$0xf]
        %v253 = vld [vmem:[#allocation5 + $0x24] sm:$0xf]
        %v254 = vld [vmem:[#allocation5 + $0x28] sm:$0xf]
        %v255 = vld [vmem:[#allocation5 + $0x2c] sm:$0xf]
        %v256 = vld [vmem:[#allocation5 + $0x30] sm:$0xf]
        %v257 = vld [vmem:[#allocation5 + $0x34] sm:$0xf]
        %v258 = vld [vmem:[#allocation5 + $0x38] sm:$0xf]
        %v259 = vld [vmem:[#allocation5 + $0x3c] sm:$0xf]
        %v260 = vld [vmem:[#allocation5 + $0x40] sm:$0xf]
        %v261 = vld [vmem:[#allocation5 + $0x44] sm:$0xf]
        %v262 = vld [vmem:[#allocation5 + $0x48] sm:$0xf]
        %v263 = vld [vmem:[#allocation5 + $0x4c] sm:$0xf]
        %v264 = vld [vmem:[#allocation5 + $0x50] sm:$0xf]
        %v265 = vld [vmem:[#allocation5 + $0x54] sm:$0xf]
        %v266 = vld [vmem:[#allocation5 + $0x58] sm:$0xf]
        %v267 = vld [vmem:[#allocation5 + $0x5c] sm:$0xf]
        %v268 = vld [vmem:[#allocation5 + $0x60] sm:$0xf]
        %v269 = vld [vmem:[#allocation5 + $0x64] sm:$0xf]
        %v270 = vld [vmem:[#allocation5 + $0x68] sm:$0xf]
        %v271 = vld [vmem:[#allocation5 + $0x6c] sm:$0xf]
        %v272 = vld [vmem:[#allocation5 + $0x70] sm:$0xf]
        %v273 = vld [vmem:[#allocation5 + $0x74] sm:$0xf]
        %v274 = vld [vmem:[#allocation5 + $0x78] sm:$0xf]
        %v275 = vld [vmem:[#allocation5 + $0x7c] sm:$0xf]
        %v276 = vld [vmem:[%s2] sm:$0x1]
        %v278 = vlaneseq
        %v279 = vshrl.u32 %v278, 7
        %v280 = vsub.s32 0, %v279
        %v281 = vrot.slane %v276, %v280
        %v315 = vunpack.c.l.b16 %v244
        %v316 = vunpack.c.l.b16 %v245
        %v317 = vunpack.c.l.b16 %v246
        %v318 = vunpack.c.l.b16 %v247
        %v319 = vunpack.c.l.b16 %v248
        %v320 = vunpack.c.l.b16 %v249
        %v321 = vunpack.c.l.b16 %v250
        %v322 = vunpack.c.l.b16 %v251
        %v323 = vunpack.c.l.b16 %v252
        %v324 = vunpack.c.l.b16 %v253
        %v325 = vunpack.c.l.b16 %v254
        %v326 = vunpack.c.l.b16 %v255
        %v327 = vunpack.c.l.b16 %v256
        %v328 = vunpack.c.l.b16 %v257
        %v329 = vunpack.c.l.b16 %v258
        %v330 = vunpack.c.l.b16 %v259
        %v331 = vunpack.c.l.b16 %v260
        %v332 = vunpack.c.l.b16 %v261
        %v333 = vunpack.c.l.b16 %v262
        %v334 = vunpack.c.l.b16 %v263
        %v335 = vunpack.c.l.b16 %v264
        %v336 = vunpack.c.l.b16 %v265
        %v337 = vunpack.c.l.b16 %v266
        %v338 = vunpack.c.l.b16 %v267
        %v339 = vunpack.c.l.b16 %v268
        %v340 = vunpack.c.l.b16 %v269
        %v341 = vunpack.c.l.b16 %v270
        %v342 = vunpack.c.l.b16 %v271
        %v343 = vunpack.c.l.b16 %v272
        %v344 = vunpack.c.l.b16 %v273
        %v345 = vunpack.c.l.b16 %v274
        %v346 = vunpack.c.l.b16 %v275
        %v347 = vpack.c.b16 %v316, %v315
        %v348 = vpack.c.b16 %v318, %v317
        %v349 = vpack.c.b16 %v320, %v319
        %v350 = vpack.c.b16 %v322, %v321
        %v351 = vpack.c.b16 %v324, %v323
        %v352 = vpack.c.b16 %v326, %v325
        %v353 = vpack.c.b16 %v328, %v327
        %v354 = vpack.c.b16 %v330, %v329
        %v355 = vpack.c.b16 %v332, %v331
        %v356 = vpack.c.b16 %v334, %v333
        %v357 = vpack.c.b16 %v336, %v335
        %v358 = vpack.c.b16 %v338, %v337
        %v359 = vpack.c.b16 %v340, %v339
        %v360 = vpack.c.b16 %v342, %v341
        %v361 = vpack.c.b16 %v344, %v343
        %v362 = vpack.c.b16 %v346, %v345
        %379 = vmatprep.subr.bf16.mxu0 0
        %380 = vmatpush1.bf16.msra.mxu0 %v347
        %381 = vmatprep.subr.bf16.mxu0 0
        %382 = vmatpush1.bf16.msra.mxu0 %v348
        %383 = vmatprep.subr.bf16.mxu0 0
        %384 = vmatpush1.bf16.msra.mxu0 %v349
        %385 = vmatprep.subr.bf16.mxu0 0
        %386 = vmatpush1.bf16.msra.mxu0 %v350
        %387 = vmatprep.subr.bf16.mxu0 0
        %388 = vmatpush1.bf16.msra.mxu0 %v351
        %389 = vmatprep.subr.bf16.mxu0 0
        %390 = vmatpush1.bf16.msra.mxu0 %v352
        %391 = vmatprep.subr.bf16.mxu0 0
        %392 = vmatpush1.bf16.msra.mxu0 %v353
        %393 = vmatprep.subr.bf16.mxu0 0
        %394 = vmatpush1.bf16.msra.mxu0 %v354
        %395 = vmatprep.subr.bf16.mxu0 0
        %396 = vmatpush1.bf16.msra.mxu0 %v355
        %397 = vmatprep.subr.bf16.mxu0 0
        %398 = vmatpush1.bf16.msra.mxu0 %v356
        %399 = vmatprep.subr.bf16.mxu0 0
        %400 = vmatpush1.bf16.msra.mxu0 %v357
        %401 = vmatprep.subr.bf16.mxu0 0
        %402 = vmatpush1.bf16.msra.mxu0 %v358
        %403 = vmatprep.subr.bf16.mxu0 0
        %404 = vmatpush1.bf16.msra.mxu0 %v359
        %405 = vmatprep.subr.bf16.mxu0 0
        %406 = vmatpush1.bf16.msra.mxu0 %v360
        %407 = vmatprep.subr.bf16.mxu0 0
        %408 = vmatpush1.bf16.msra.mxu0 %v361
        %409 = vmatprep.subr.bf16.mxu0 0
        %410 = vmatpush1.bf16.msra.mxu0 %v362
        %411 = vmatprep.mubr.bf16.mxu0 %v241
        %412 = vmatmul.mubr.bf16.gmra.mrb[0].mxu0 %v240
        %v413 = vpop.f32.mrb[0].mxu0
        %v414 = vadd.f32 %v281, %v413
        %v415 = vpop.f32.mrb[0].mxu0
        %v416 = vpop.f32.mrb[0].mxu0
        %v417 = vadd.f32 %v281, %v416
        %v418 = vpop.f32.mrb[0].mxu0
        %419 = vmatprep.mubr.bf16.mxu0 %v243
        %420 = vmatmul.mubr.bf16.gmra.mrb[0].mxu0 %v242
        %v421 = vpop.f32.mrb[0].mxu0
        %v422 = vadd.f32 %v281, %v421
        %v423 = vpop.f32.mrb[0].mxu0
        %v424 = vpop.f32.mrb[0].mxu0
        %v425 = vadd.f32 %v281, %v424
        %v426 = vpop.f32.mrb[0].mxu0
        %427 = vdwg.mxu0
        %v428 = vpack.c.bf16 %v417, %v414
        %v429 = vpack.c.bf16 %v425, %v422
        %v432 = vunpack.c.l.b16 %v428
        %v433 = vunpack.c.h.b16 %v428
        %v434 = vunpack.c.l.b16 %v429
        %v435 = vunpack.c.h.b16 %v429
        %v436 = vpack.c.b16 %v432, %v432
        %v437 = vpack.c.b16 %v433, %v433
        %v438 = vpack.c.b16 %v434, %v434
        %v439 = vpack.c.b16 %v435, %v435
        %444 = vst [vmem:[%s211] sm:$0xf] %v436
        %445 = vst [vmem:[%s211 + $0x4] sm:$0xf] %v437
        %446 = vst [vmem:[%s211 + $0x8] sm:$0xf] %v438
        %447 = vst [vmem:[%s211 + $0xc] sm:$0xf] %v439
        %s448 = sand.u32 %s97, 1
        %s449 = scalar_lea.sflag [#allocation4], %s448
        %s450 = sand.u32 %s97, 1
        %s451 = smul.addr %s450, 16
        %s452 = scalar_lea.vmem [#allocation7], %s451
        // Predicated region
        $region41: #{tpu_custom_call.1} parent=31 // pred_check
          %p453 = pneg %p107
        $region42: #{tpu_custom_call.1} parent=31 // pred_check_branch
          %455 = sbr.rel (%p453) target = $region44
        $region43: #{tpu_custom_call.1} parent=31 // pred_region
          %s456 = smul.u32 4, %s21
          %s457 = ssub.s32 6, %s456
          %p458 = scmp.lt.s32.totalorder %s457, 4
          %s459 = scalar_select %p458, %s457, 4
          %s460 = smul.u32 64, %s459
          %s462 = ssub.s32 256, %s460
          %463 = vsyncadd %s449, %s462
          %p464 = scmp.ne.s32.totalorder 0, %s460
          %s465 = smul.addr %s456, 64
          %s466 = scalar_lea.hbm %s3, %s465
          %s467 = smul.u32 4, %s459
          %s468 = sshll.u32 %s452, 4
          %s469 = int_to_ptr.vmem [resolvable:$true] %s468
          %s470 = sshll.u32 %s467, 4
          %474 = dma.vmem_to_hbm [thread:$0]  (%p464), %s469, %s470, %s466, %s449, 64, 64, 4
        $region44: #{tpu_custom_call.1} parent=31 // pred_fallthru
          _
      $region32: #{tpu_custom_call.1} parent=5 // pred_fallthru
        _
      %p475 = scmp.le.s32.totalorder 2, %s16
      // Predicated region
      $region45: #{tpu_custom_call.1} parent=5 // pred_check
        %p476 = pneg %p475
      $region46: #{tpu_custom_call.1} parent=5 // pred_check_branch
        %478 = sbr.rel (%p476) target = $region48
      $region47: #{tpu_custom_call.1} parent=5 // pred_region
        %s479 = ssub.s32 %s16, 2
        // Predicated region
        $region49: #{tpu_custom_call.1} parent=47 // pred_check
          %p480 = pneg %p113
        $region50: #{tpu_custom_call.1} parent=47 // pred_check_branch
          %482 = sbr.rel (%p480) target = $region52
        $region51: #{tpu_custom_call.1} parent=47 // pred_region
          %s483 = sand.u32 %s98, 1
          %s484 = scalar_lea.sflag [#allocation4], %s483
          %s485 = sand.u32 %s98, 1
          %s486 = smul.addr %s485, 16
          %s487 = scalar_lea.vmem [#allocation7], %s486
          %488 = dma.done %s484, 256
        $region52: #{tpu_custom_call.1} parent=47 // pred_fallthru
          _
      $region48: #{tpu_custom_call.1} parent=5 // pred_fallthru
        _
    $region6: #{tpu_custom_call.1} parent=1 // loop_footer
      %s20 = sadd.s32 1, %s16
    $region7: #{tpu_custom_call.1} parent=1 // loop_footer_branch
      %15 = sbr.rel target = $region3
    $region8: #{tpu_custom_call.1} parent=1 // loop_exit
      _
    %489 = vsyncpa [#allocation3], 1
    %s490 = scalar_lea.sflag [#allocation3], 1
    %491 = vsyncpa %s490, 1
    %492 = vsyncpa [#allocation6], 1
    %493 = vsyncpa [#allocation4], 1
    %s494 = scalar_lea.sflag [#allocation4], 1
    %495 = vsyncpa %s494, 1

</llo_original>
